<compile_context>
chip_gen: v7x
topology: tpu7x:2x2x1
jax: 0.10.0
libtpu: 0.0.40
codegen_flags: <defaults>
</compile_context>

<pallas_src>
import jax
import jax.numpy as jnp
from jax.experimental import pallas as pl
from jax.experimental.pallas import tpu as pltpu


def _round_up(v, m):
    return (v + m - 1) // m * m


def _vmem_capacity_bytes():
    """Physical VMEM of the local TPU generation (v5e/v6e: 128 MiB, v7x: 64 MiB/TC)."""
    try:
        cap = getattr(pltpu.get_tpu_info(), "vmem_capacity_bytes", None)
        if cap:
            return int(cap)
    except Exception:
        pass
    return 64 * 1024 * 1024  # conservative fallback (v7x per-TensorCore VMEM)


def _row_solve_kernel(a_ref, k_ref, minv_ref, out_ref):
    """R_i = K_i Minv / (a * K_i Minv K_i^T) for one (tile_b, nfea) batch tile."""
    k = k_ref[...]                                                      # stream dtype (bf16/f32)
    # MXU matmul, always with f32 accumulation (native bf16 path when streaming bf16).
    w = jnp.dot(k, minv_ref[...], preferred_element_type=jnp.float32)   # (tile_b, nfea) f32
    # Row-wise quadratic form in f32 (upcast k: keeps the constraint a*<R_i,K_i>=1 tight;
    # v5e's VPU has no bf16 anyway).  Scalar `a` lives in SMEM.
    denom = a_ref[0] * jnp.sum(w * k.astype(jnp.float32), axis=-1, keepdims=True)
    # EUP reciprocal (separate slot, ~free) + one Newton step for f32 accuracy.
    # Rows with K_i ~ 0 are infeasible in the original QP too; they are left unguarded.
    r = pl.reciprocal(denom, approx=True)
    r = r * (2.0 - denom * r)
    out_ref[...] = (w * r).astype(out_ref.dtype)


def _pick_tile(batch, nfea, stream_isize, out_isize, vmem_budget, max_tile_b):
    """Largest batch tile (multiple of 8 sublanes) whose VMEM working set fits the budget,
    capped so the grid has >= ~4 steps (v7x megacore sharding + DMA/compute overlap)."""
    minv_bytes = 2 * nfea * nfea * stream_isize          # resident Minv (count 2 bufs, worst case)

    def need(t):
        return (minv_bytes
                + 2 * t * nfea * stream_isize            # double-buffered K tile
                + 2 * t * nfea * out_isize               # double-buffered out tile
                + 3 * t * nfea * 4)                      # f32 temporaries (W, upcast K, product)

    cap = max(8, _round_up(-(-batch // 4), 8))           # aim for >= 4 grid steps
    tile = max(8, min(max_tile_b, cap, _round_up(batch, 8)))
    while tile > 8 and need(tile) > vmem_budget:
        tile -= 8
    # TODO(synk): if need(8) still exceeds the budget (huge nfea), a feature-dim (K) tiled
    # accumulator variant would be required; not needed for the shapes OptNet uses.
    return tile, need(tile)


def optnet_forward(x, a, beta, exc_rel, imp_rel, phi, gamma, *,
                   stream_dtype=jnp.bfloat16, out_dtype=jnp.float32, max_tile_b=1024):
    x = jnp.asarray(x, jnp.float32)
    batch, nfea = x.shape
    nclass = beta.shape[0]
    a = jnp.asarray(a, jnp.float32)

    # --- O(nclass^2) prologue in plain JAX (a Pallas launch for a few-KB workload is
    #     pure launch/DMA overhead). ---
    AB = jnp.asarray(beta, jnp.float32) + a * jnp.eye(nclass, dtype=jnp.float32)
    exc = jnp.max(AB @ jnp.asarray(exc_rel, jnp.float32), axis=1)
    imp = jnp.max(AB @ jnp.asarray(imp_rel, jnp.float32), axis=1)
    s = jnp.sum(exc * exc) + jnp.sum(imp * imp)   # optsolver only uses ||exc||^2 + ||imp||^2

    # M is SPD (gamma > 0, Phi PSD): Cholesky solve.
    # TODO(synk): the original iterative SPG projected-gradient solver (and the scipy MINRES
    # backward) has no clean Pallas equivalent; we use its closed-form KKT fixed point,
    # with the small nfea x nfea factorization in plain JAX.
    m = (gamma / batch) * jnp.eye(nfea, dtype=jnp.float32) \
        + (s / batch) * jnp.asarray(phi, jnp.float32)
    minv = jax.scipy.linalg.cho_solve(jax.scipy.linalg.cho_factor(m),
                                      jnp.eye(nfea, dtype=jnp.float32))

    # --- small-problem bypass: a single tiny tile is pure launch + DMA overhead; XLA
    #     fuses this into the Cholesky prologue for free. ---
    if batch <= 64 and nfea <= 128:
        w = x @ minv
        return (w / (a * jnp.sum(w * x, axis=1, keepdims=True))).astype(out_dtype)

    # --- batch hot path: one Pallas kernel; no HBM padding of x (full-extent last-dim
    #     blocks, ragged batch tail handled by Pallas' masked OOB tile). ---
    stream_dtype = jnp.dtype(stream_dtype)
    x_s = x.astype(stream_dtype)      # in a real model this cast fuses into x's producer
    minv_s = minv.astype(stream_dtype)
    a_smem = jnp.reshape(a, (1,)).astype(jnp.float32)

    out_isize = jnp.dtype(out_dtype).itemsize
    vmem_cap = _vmem_capacity_bytes()
    tile_b, need_bytes = _pick_tile(batch, nfea, stream_dtype.itemsize, out_isize,
                                    int(0.75 * vmem_cap), max_tile_b)
    # need_bytes already counts double-buffering; add headroom for Mosaic internal scratch.
    vmem_limit = int(min(max(need_bytes + (8 << 20), 32 << 20), vmem_cap))

    cost = pl.CostEstimate(
        flops=2 * batch * nfea * nfea + 3 * batch * nfea,     # matmul + row quadratic form
        transcendentals=batch,                                # one reciprocal per row
        bytes_accessed=(x_s.size * stream_dtype.itemsize
                        + minv_s.size * stream_dtype.itemsize
                        + batch * nfea * out_isize),
    )

    out = pl.pallas_call(
        _row_solve_kernel,
        out_shape=jax.ShapeDtypeStruct((batch, nfea), out_dtype),
        grid=(pl.cdiv(batch, tile_b),),
        in_specs=[
            # Scalar `a` -> SMEM (intended path for loop scalars).
            pl.BlockSpec(memory_space=pltpu.MemorySpace.SMEM),
            # K tile, streamed over the batch grid (last dim == full array dim: legal).
            pl.BlockSpec((tile_b, nfea), lambda i: (i, 0)),
            # Minv: constant index map -> DMA'd once, stays resident across the grid.
            pl.BlockSpec((nfea, nfea), lambda i: (0, 0)),
        ],
        out_specs=pl.BlockSpec((tile_b, nfea), lambda i: (i, 0)),
        compiler_params=pltpu.CompilerParams(
            # Shards the batch grid across the 2 TensorCores on v7x; no-op on v5e/v6e.
            dimension_semantics=("parallel",),
            vmem_limit_bytes=vmem_limit,
        ),
        cost_estimate=cost,
    )(a_smem, x_s, minv_s)
    return out


if __name__ == "__main__":
    key = jax.random.PRNGKey(0)
    gamma, a_value = 0.5, 1.5

    # Sized so the Pallas path runs with several grid steps, a ragged batch tail
    # (300 = 3*80 + 60) and a non-128 feature width (64).
    batch, nfea, nclass = 300, 64, 5
    k1, k2, k3, k4 = jax.random.split(key, 4)
    x = jax.random.normal(k1, (batch, nfea), dtype=jnp.float32)        # K_batch
    g = jax.random.normal(k2, (nfea, nfea), dtype=jnp.float32)
    phi = (g @ g.T) / nfea                                             # symmetric PSD Phi
    exc_rel = jax.random.uniform(k3, (nclass, nclass), dtype=jnp.float32)
    imp_rel = jax.random.uniform(k4, (nclass, nclass), dtype=jnp.float32)
    beta = jnp.zeros((nclass, nclass), jnp.float32)   # matches nn.Parameter zeros init
    a = jnp.asarray(a_value, jnp.float32)             # matches torch.tensor(a_value)

    # Pure-JAX references of the same closed-form solution.
    AB = beta + a * jnp.eye(nclass, dtype=jnp.float32)
    s = (jnp.sum(jnp.max(AB @ exc_rel, axis=1) ** 2)
         + jnp.sum(jnp.max(AB @ imp_rel, axis=1) ** 2))
    M = (gamma / batch) * jnp.eye(nfea, dtype=jnp.float32) + (s / batch) * phi
    minv = jax.scipy.linalg.cho_solve(jax.scipy.linalg.cho_factor(M),
                                      jnp.eye(nfea, dtype=jnp.float32))

    def closed_form(xx, mm):
        w = xx @ mm
        return w / (a * jnp.sum(w * xx, axis=1, keepdims=True))

    ref = closed_form(x, minv)                                          # f32 operands
    xq = x.astype(jnp.bfloat16).astype(jnp.float32)
    ref_q = closed_form(xq, minv.astype(jnp.bfloat16).astype(jnp.float32))  # bf16-quantized operands

    # f32-streamed kernel: must match the module's f32 forward tightly.
    out_f32 = jax.block_until_ready(
        optnet_forward(x, a, beta, exc_rel, imp_rel, phi, gamma, stream_dtype=jnp.float32))
    assert jnp.allclose(out_f32, ref, rtol=1e-3, atol=1e-3), "f32 kernel mismatch vs reference"
    assert jnp.allclose(a * jnp.sum(out_f32 * x, axis=1), 1.0, rtol=1e-3, atol=1e-3)

    # Default bf16-streamed kernel: bit-faithful to the bf16-quantized operands, and the
    # QP equality constraint a*<R_i, K_i> = 1 holds to quantization level on the true x.
    out_bf16 = jax.block_until_ready(
        optnet_forward(x, a, beta, exc_rel, imp_rel, phi, gamma))
    assert jnp.allclose(out_bf16, ref_q, rtol=1e-3, atol=1e-3), \
        "bf16 kernel mismatch vs quantized reference"
    assert jnp.allclose(a * jnp.sum(out_bf16 * x, axis=1), 1.0, atol=5e-3)

    # Small-problem bypass path (tiny workload -> plain XLA, no kernel launch).
    xs, phis, bs, nf = x[:16, :32], phi[:32, :32], 16, 32
    outs = jax.block_until_ready(optnet_forward(xs, a, beta, exc_rel, imp_rel, phis, gamma))
    Ms = (gamma / bs) * jnp.eye(nf, dtype=jnp.float32) + (s / bs) * phis
    minvs = jax.scipy.linalg.cho_solve(jax.scipy.linalg.cho_factor(Ms),
                                       jnp.eye(nf, dtype=jnp.float32))
    ws = xs @ minvs
    refs = ws / (a * jnp.sum(ws * xs, axis=1, keepdims=True))
    assert jnp.allclose(outs, refs, rtol=1e-3, atol=1e-3), "bypass mismatch vs reference"

    print("KERNEL_OK")
</pallas_src>

<mosaic_0001>
module attributes {stable_mosaic.version = 11 : i64} {
  func.func @_row_solve_kernel(%arg0: i32, %arg1: memref<1xf32, #tpu.memory_space<smem>>, %arg2: memref<80x64xf32, #tpu.memory_space<vmem>>, %arg3: memref<64x64xf32, #tpu.memory_space<vmem>>, %arg4: memref<80x64xf32, #tpu.memory_space<vmem>>) attributes {dimension_semantics = [#tpu.dimension_semantics<parallel>], iteration_bounds = array<i64: 4>, scalar_prefetch = 0 : i64, scratch_operands = 0 : i64, tpu.core_type = #tpu.core_type<tc>, window_params = [{transform_indices = @transform_0, window_bounds = array<i64: 1>}, {transform_indices = @transform_1, window_bounds = array<i64: 80, 64>}, {pipeline_mode = #tpu.pipeline_mode<synchronous>, transform_indices = @transform_2, window_bounds = array<i64: 64, 64>}, {transform_indices = @transform_3, window_bounds = array<i64: 80, 64>}]} {
    %c0 = arith.constant 0 : index
    %c0_0 = arith.constant 0 : index
    %0 = vector.load %arg2[%c0, %c0_0] : memref<80x64xf32, #tpu.memory_space<vmem>>, vector<80x64xf32>
    %c0_1 = arith.constant 0 : index
    %c0_2 = arith.constant 0 : index
    %1 = vector.load %arg3[%c0_1, %c0_2] : memref<64x64xf32, #tpu.memory_space<vmem>>, vector<64x64xf32>
    %cst = arith.constant dense<0.000000e+00> : vector<80x64xf32>
    %2 = tpu.matmul %0, %1, %cst {dimension_numbers = #tpu.dot_dimension_numbers<[1], [0], [0], [1], [0, 0, 1, 1], [], []>} : vector<80x64xf32>, vector<64x64xf32>, vector<80x64xf32> -> vector<80x64xf32>
    %c0_3 = arith.constant 0 : index
    %3 = memref.load %arg1[%c0_3] : memref<1xf32, #tpu.memory_space<smem>>
    %4 = arith.mulf %2, %0 : vector<80x64xf32>
    %cst_4 = arith.constant dense<0.000000e+00> : vector<80xf32>
    %5 = vector.multi_reduction <add>, %4, %cst_4 [1] : vector<80x64xf32> to vector<80xf32>
    %6 = vector.shape_cast %5 : vector<80xf32> to vector<80x1xf32>
    %7 = vector.broadcast %3 : f32 to vector<80x1xf32>
    %8 = arith.mulf %7, %6 : vector<80x1xf32>
    %9 = tpu.reciprocal %8 {approx = true} : vector<80x1xf32> -> vector<80x1xf32>
    %10 = arith.mulf %8, %9 : vector<80x1xf32>
    %cst_5 = arith.constant 2.000000e+00 : f32
    %11 = vector.broadcast %cst_5 : f32 to vector<80x1xf32>
    %12 = arith.subf %11, %10 : vector<80x1xf32>
    %13 = arith.mulf %9, %12 : vector<80x1xf32>
    %14 = vector.broadcast %13 : vector<80x1xf32> to vector<80x64xf32>
    %15 = arith.mulf %2, %14 : vector<80x64xf32>
    %c0_6 = arith.constant 0 : index
    %c0_7 = arith.constant 0 : index
    %16 = vector.load %arg4[%c0_6, %c0_7] : memref<80x64xf32, #tpu.memory_space<vmem>>, vector<80x64xf32>
    tpu.vector_store %arg4[%c0_6, %c0_7], %15 {strides = array<i32>} : memref<80x64xf32, #tpu.memory_space<vmem>>, vector<80x64xf32>,
    return
  }
  func.func @transform_0(%arg0: i32) -> i32 {
    %c0_i32 = arith.constant 0 : i32
    %c0_i32_0 = arith.constant 0 : i32
    return %c0_i32 : i32
  }
  func.func @transform_1(%arg0: i32) -> (i32, i32) {
    %c0_i32 = arith.constant 0 : i32
    %c0_i32_0 = arith.constant 0 : i32
    return %arg0, %c0_i32 : i32, i32
  }
  func.func @transform_2(%arg0: i32) -> (i32, i32) {
    %c0_i32 = arith.constant 0 : i32
    %c0_i32_0 = arith.constant 0 : i32
    %c0_i32_1 = arith.constant 0 : i32
    return %c0_i32, %c0_i32_0 : i32, i32
  }
  func.func @transform_3(%arg0: i32) -> (i32, i32) {
    %c0_i32 = arith.constant 0 : i32
    %c0_i32_0 = arith.constant 0 : i32
    return %arg0, %c0_i32 : i32, i32
  }
}

</mosaic_0001>

<llo_original>
// kernel: tpu_custom_call.1
$region0: #{tpu_custom_call.1}
  #allocation0 [shape = 'u32[]', space=smem, size = 0x4, offset = 0x4, fixed_abs, tag = 'smem constant byte address 0x4 - core index']
  #allocation1 [shape = 'u32[144,128]{1,0:T(1,128)}', space=vmem, size = 0x12000, scoped, tag = 'internal scratch']
  #allocation2 [shape = 'f32[1]{0:T(128)S(6)}', space=smem, size = 0x200, scoped, tag = 'scoped memory for tpu_custom_call.1']
  %s0 = inlined_call_operand.<no memory space> [shape: f32[1], index: 0, kind: input, shape index: {}]
  %s1 = inlined_call_operand.vmem [shape: f32[300,64], index: 1, kind: input, shape index: {}]
  %s2 = inlined_call_operand.vmem [shape: f32[64,64], index: 2, kind: input, shape index: {}]
  %s3 = inlined_call_operand.vmem [shape: f32[300,64], index: 3, kind: output, shape index: {}]
  %s4 = sld [smem:[#allocation0]]
  $region93: #{tpu_custom_call.1} parent=0
    _
  %s6 = ssub.s32 1, %s4
  %s7 = scalar_select 0, %s6, %s4
  %8 = sst [smem:[#allocation2]] %s0
  $region1: #{tpu_custom_call.1} parent=0
    #allocation3 [shape = 'u8[81920]{0}', space=vmem, size = 0x14000, scoped, tag = 'output window, operand 0']
    loop: start=0, step=1, limit=6
    $region2: #{tpu_custom_call.1} parent=1 // loop_pre_header
      _
    $region3: #{tpu_custom_call.1} parent=1 // loop_header
      %s10 = sphi 0, %s14
      %p11 = scmp.ge.s32.totalorder %s10, 6
      %s18 = sphi 0, %s18
      %s20 = sphi 0, %s18
      %s21 = sphi 0, %s20
      %s35 = sphi 0, %s21
      %s41 = sphi 0, %s43
      %s44 = sphi 0, %s41
      %s45 = sphi 0, %s44
      %s61 = sphi 0, %s45
      %s65 = sphi 0, %s65
      %s67 = sphi 0, %s65
      %s68 = sphi 0, %s67
      %s82 = sphi 0, %s68
      %s88 = sphi 0, %s90
      %s91 = sphi 0, %s88
      %s92 = sphi 0, %s91
      %s108 = sphi 0, %s92
    $region4: #{tpu_custom_call.1} parent=1 // loop_header_branch
      %13 = sbr.rel (%p11) target = $region8
    $region5: #{tpu_custom_call.1} parent=1 // loop_body
      %s15 = ssub.s32 %s10, 1
      %s16 = ssub.s32 %s10, 2
      %s17 = sadd.s32 %s10, 1
      %s19 = sadd.s32 %s18, 1
      %p22 = scmp.eq.s32.totalorder %s10, 3
      %p23 = scmp.ne.s32.totalorder %s18, %s20
      %p24 = scmp.eq.s32.totalorder %s10, 0
      %p25 = por %p23, %p24
      %p26 = scmp.ne.s32.totalorder %s18, %s20
      %p27 = scmp.eq.s32.totalorder %s15, 3
      %p28 = por %p26, %p27
      %p29 = scmp.ne.s32.totalorder %s20, %s21
      %p30 = scmp.eq.s32.totalorder %s15, 0
      %p31 = por %p29, %p30
      %p32 = scmp.ne.s32.totalorder %s20, %s21
      %p33 = scmp.eq.s32.totalorder %s16, 3
      %p34 = por %p32, %p33
      %p36 = scmp.ne.s32.totalorder %s21, %s35
      %p37 = scmp.eq.s32.totalorder %s16, 0
      %p38 = por %p36, %p37
      %s39 = ssub.s32 %s10, %s17
      %p40 = scmp.eq.s32.totalorder %s39, 0
      %s42 = sadd.s32 %s41, 1
      %s43 = scalar_select %p40, %s41, %s42
      %p46 = pneg %p40
      %p47 = scmp.eq.s32.totalorder %s10, 3
      %p48 = por %p46, %p47
      %p49 = scmp.ne.s32.totalorder %s41, %s44
      %p50 = scmp.eq.s32.totalorder %s10, 0
      %p51 = por %p49, %p50
      %p52 = scmp.ne.s32.totalorder %s41, %s44
      %p53 = scmp.eq.s32.totalorder %s15, 3
      %p54 = por %p52, %p53
      %p55 = scmp.ne.s32.totalorder %s44, %s45
      %p56 = scmp.eq.s32.totalorder %s15, 0
      %p57 = por %p55, %p56
      %p58 = scmp.ne.s32.totalorder %s44, %s45
      %p59 = scmp.eq.s32.totalorder %s16, 3
      %p60 = por %p58, %p59
      %p62 = scmp.ne.s32.totalorder %s45, %s61
      %p63 = scmp.eq.s32.totalorder %s16, 0
      %p64 = por %p62, %p63
      %s66 = sadd.s32 %s65, 1
      %p69 = scmp.eq.s32.totalorder %s10, 3
      %p70 = scmp.ne.s32.totalorder %s65, %s67
      %p71 = scmp.eq.s32.totalorder %s10, 0
      %p72 = por %p70, %p71
      %p73 = scmp.ne.s32.totalorder %s65, %s67
      %p74 = scmp.eq.s32.totalorder %s15, 3
      %p75 = por %p73, %p74
      %p76 = scmp.ne.s32.totalorder %s67, %s68
      %p77 = scmp.eq.s32.totalorder %s15, 0
      %p78 = por %p76, %p77
      %p79 = scmp.ne.s32.totalorder %s67, %s68
      %p80 = scmp.eq.s32.totalorder %s16, 3
      %p81 = por %p79, %p80
      %p83 = scmp.ne.s32.totalorder %s68, %s82
      %p84 = scmp.eq.s32.totalorder %s16, 0
      %p85 = por %p83, %p84
      %s86 = ssub.s32 %s10, %s17
      %p87 = scmp.eq.s32.totalorder %s86, 0
      %s89 = sadd.s32 %s88, 1
      %s90 = scalar_select %p87, %s88, %s89
      %p93 = pneg %p87
      %p94 = scmp.eq.s32.totalorder %s10, 3
      %p95 = por %p93, %p94
      %p96 = scmp.ne.s32.totalorder %s88, %s91
      %p97 = scmp.eq.s32.totalorder %s10, 0
      %p98 = por %p96, %p97
      %p99 = scmp.ne.s32.totalorder %s88, %s91
      %p100 = scmp.eq.s32.totalorder %s15, 3
      %p101 = por %p99, %p100
      %p102 = scmp.ne.s32.totalorder %s91, %s92
      %p103 = scmp.eq.s32.totalorder %s15, 0
      %p104 = por %p102, %p103
      %p105 = scmp.ne.s32.totalorder %s91, %s92
      %p106 = scmp.eq.s32.totalorder %s16, 3
      %p107 = por %p105, %p106
      %p109 = scmp.ne.s32.totalorder %s92, %s108
      %p110 = scmp.eq.s32.totalorder %s16, 0
      %p111 = por %p109, %p110
      %p112 = scmp.le.s32.totalorder 1, %s10
      %p113 = scmp.lt.s32.totalorder %s10, 5
      %p114 = pnand %p112, %p113
      %p115 = pneg %p114
      // Predicated region
      $region9: #{tpu_custom_call.1} parent=5 // pred_check
        _
      $region10: #{tpu_custom_call.1} parent=5 // pred_check_branch
        %117 = sbr.rel (%p114) target = $region12
      $region11: #{tpu_custom_call.1} parent=5 // pred_region
        %s118 = ssub.s32 %s10, 1
        // Predicated region
        $region13: #{tpu_custom_call.1} parent=11 // pred_check
          %p119 = pneg %p31
        $region14: #{tpu_custom_call.1} parent=11 // pred_check_branch
          %121 = sbr.rel (%p119) target = $region16
        $region15: #{tpu_custom_call.1} parent=11 // pred_region
          _
        $region16: #{tpu_custom_call.1} parent=11 // pred_fallthru
          _
        // Predicated region
        $region17: #{tpu_custom_call.1} parent=11 // pred_check
          %p122 = pneg %p78
        $region18: #{tpu_custom_call.1} parent=11 // pred_check_branch
          %124 = sbr.rel (%p122) target = $region20
        $region19: #{tpu_custom_call.1} parent=11 // pred_region
          _
        $region20: #{tpu_custom_call.1} parent=11 // pred_fallthru
          _
      $region12: #{tpu_custom_call.1} parent=5 // pred_fallthru
        _
      %p125 = scmp.lt.s32.totalorder %s10, 4
      // Predicated region
      $region21: #{tpu_custom_call.1} parent=5 // pred_check
        %p126 = pneg %p125
      $region22: #{tpu_custom_call.1} parent=5 // pred_check_branch
        %128 = sbr.rel (%p126) target = $region24
      $region23: #{tpu_custom_call.1} parent=5 // pred_region
        // Predicated region
        $region25: #{tpu_custom_call.1} parent=23 // pred_check
          %p129 = pneg %p51
        $region26: #{tpu_custom_call.1} parent=23 // pred_check_branch
          %131 = sbr.rel (%p129) target = $region28
        $region27: #{tpu_custom_call.1} parent=23 // pred_region
          %s132 = smul.u32 10, %s10
          %s133 = ssub.s32 38, %s132
          %p134 = scmp.lt.s32.totalorder %s133, 10
          %s135 = scalar_select %p134, %s133, 10
          %s136 = smul.u32 128, %s135
          %p137 = scmp.lt.s32.totalorder %s132, 37
          %s138 = scalar_select %p137, %s132, 37
          %s139 = smul.addr %s138, 8
          %s140 = scalar_lea.vmem %s1, %s139
          %s141 = smul.u32 10, %s10
          %s142 = ssub.s32 38, %s141
          %p143 = scmp.lt.s32.totalorder %s142, 10
          %s144 = scalar_select %p143, %s142, 10
          %s145 = smul.u32 128, %s144
        $region28: #{tpu_custom_call.1} parent=23 // pred_fallthru
          _
      $region24: #{tpu_custom_call.1} parent=5 // pred_fallthru
        _
      %p146 = scmp.le.s32.totalorder 1, %s10
      %p147 = scmp.lt.s32.totalorder %s10, 5
      %p148 = pnand %p146, %p147
      %p149 = pneg %p148
      // Predicated region
      $region29: #{tpu_custom_call.1} parent=5 // pred_check
        _
      $region30: #{tpu_custom_call.1} parent=5 // pred_check_branch
        %151 = sbr.rel (%p148) target = $region32
      $region31: #{tpu_custom_call.1} parent=5 // pred_region
        %s152 = ssub.s32 %s10, 1
        %p153 = pneg %p31
        %p154 = pneg %p28
        %s155 = smul.u32 10, %s15
        %s156 = ssub.s32 38, %s155
        %p157 = scmp.lt.s32.totalorder %s156, 10
        %s158 = scalar_select %p157, %s156, 10
        %s159 = smul.u32 128, %s158
        %p160 = scmp.lt.s32.totalorder %s155, 37
        %s161 = scalar_select %p160, %s155, 37
        %s162 = smul.addr %s161, 8
        %s163 = scalar_lea.vmem %s1, %s162
        %p164 = pneg %p57
        %p165 = pneg %p54
        %p166 = pneg %p78
        %p167 = pneg %p75
        %p168 = pneg %p104
        %p169 = pneg %p101
        %s170 = sand.u32 %s91, 1
        %s171 = sand.u32 %s91, 1
        %s172 = smul.addr %s171, 80
        %s173 = scalar_lea.vmem [#allocation3], %s172
        %s174 = smul.u32 10, %s15
        %s175 = ssub.s32 38, %s174
        %p176 = scmp.lt.s32.totalorder %s175, 10
        %s177 = scalar_select %p176, %s175, 10
        %s178 = smul.u32 128, %s177
        %p179 = scmp.lt.s32.totalorder %s174, 37
        %s180 = scalar_select %p179, %s174, 37
        %s181 = smul.addr %s180, 8
        %s182 = scalar_lea.vmem %s1, %s181
        %s183 = smul.u32 10, %s15
        %s184 = ssub.s32 38, %s183
        %p185 = scmp.lt.s32.totalorder %s184, 10
        %s186 = scalar_select %p185, %s184, 10
        %s187 = smul.u32 128, %s186
        %s188 = smul.u32 10, %s15
        %s189 = ssub.s32 38, %s188
        %p190 = scmp.lt.s32.totalorder %s189, 10
        %s191 = scalar_select %p190, %s189, 10
        %s192 = smul.u32 128, %s191
        %v193 = vld [vmem:[%s182] sm:$0xff]
        %v194 = vld [vmem:[%s182 + $0x8] sm:$0xff]
        %v195 = vld [vmem:[%s182 + $0x10] sm:$0xff]
        %v196 = vld [vmem:[%s182 + $0x18] sm:$0xff]
        %v197 = vld [vmem:[%s182 + $0x20] sm:$0xff]
        %v198 = vld [vmem:[%s182 + $0x28] sm:$0xff]
        %v199 = vld [vmem:[%s182 + $0x30] sm:$0xff]
        %v200 = vld [vmem:[%s182 + $0x38] sm:$0xff]
        %v201 = vld [vmem:[%s182 + $0x40] sm:$0xff]
        %v202 = vld [vmem:[%s182 + $0x48] sm:$0xff]
        %v203 = vld [vmem:[%s2] sm:$0xff]
        %v204 = vld [vmem:[%s2 + $0x8] sm:$0xff]
        %v205 = vld [vmem:[%s2 + $0x10] sm:$0xff]
        %v206 = vld [vmem:[%s2 + $0x18] sm:$0xff]
        %v207 = vld [vmem:[%s2 + $0x20] sm:$0xff]
        %v208 = vld [vmem:[%s2 + $0x28] sm:$0xff]
        %v209 = vld [vmem:[%s2 + $0x30] sm:$0xff]
        %v210 = vld [vmem:[%s2 + $0x38] sm:$0xff]
        %vm211 = vcmask 523264
        %v213 = vsel %vm211, %v193, 0
        %v216 = vsel %vm211, %v194, 0
        %v219 = vsel %vm211, %v195, 0
        %v222 = vsel %vm211, %v196, 0
        %v225 = vsel %vm211, %v197, 0
        %v228 = vsel %vm211, %v198, 0
        %v231 = vsel %vm211, %v199, 0
        %v234 = vsel %vm211, %v200, 0
        %v237 = vsel %vm211, %v201, 0
        %v240 = vsel %vm211, %v202, 0
        %242 = vmatprep.subr.mxu0 0.0
        %243 = vmatpush1.msra.mxu0 %v203
        %244 = vmatprep.subr.mxu0 0.0
        %245 = vmatpush1.msra.mxu0 %v204
        %246 = vmatprep.subr.mxu0 0.0
        %247 = vmatpush1.msra.mxu0 %v205
        %248 = vmatprep.subr.mxu0 0.0
        %249 = vmatpush1.msra.mxu0 %v206
        %250 = vmatprep.subr.mxu0 0.0
        %251 = vmatpush1.msra.mxu0 %v207
        %252 = vmatprep.subr.mxu0 0.0
        %253 = vmatpush1.msra.mxu0 %v208
        %254 = vmatprep.subr.mxu0 0.0
        %255 = vmatpush1.msra.mxu0 %v209
        %256 = vmatprep.subr.mxu0 0.0
        %257 = vmatpush1.msra.mxu0 %v210
        %258 = vmatprep.subr.mxu0 0.0
        %259 = vmatpush1.msra.mxu0 0.0
        %260 = vmatprep.subr.mxu0 0.0
        %261 = vmatpush1.msra.mxu0 0.0
        %262 = vmatprep.subr.mxu0 0.0
        %263 = vmatpush1.msra.mxu0 0.0
        %264 = vmatprep.subr.mxu0 0.0
        %265 = vmatpush1.msra.mxu0 0.0
        %266 = vmatprep.subr.mxu0 0.0
        %267 = vmatpush1.msra.mxu0 0.0
        %268 = vmatprep.subr.mxu0 0.0
        %269 = vmatpush1.msra.mxu0 0.0
        %270 = vmatprep.subr.mxu0 0.0
        %271 = vmatpush1.msra.mxu0 0.0
        %272 = vmatprep.subr.mxu0 0.0
        %273 = vmatpush1.msra.mxu0 0.0
        %274 = vmatprep.subr.mxu0 0.0
        %275 = vmatpush1.msra.mxu0 0.0
        %276 = vmatprep.subr.mxu0 0.0
        %277 = vmatpush1.msra.mxu0 0.0
        %278 = vmatprep.subr.mxu0 0.0
        %279 = vmatpush1.msra.mxu0 0.0
        %280 = vmatprep.subr.mxu0 0.0
        %281 = vmatpush1.msra.mxu0 0.0
        %282 = vmatprep.subr.mxu0 0.0
        %283 = vmatpush1.msra.mxu0 0.0
        %284 = vmatprep.subr.mxu0 0.0
        %285 = vmatpush1.msra.mxu0 0.0
        %286 = vmatprep.subr.mxu0 0.0
        %287 = vmatpush1.msra.mxu0 0.0
        %288 = vmatprep.subr.mxu0 0.0
        %289 = vmatpush1.msra.mxu0 0.0
        %290 = vmatprep.subr.mxu0 0.0
        %291 = vmatpush1.msra.mxu0 0.0
        %292 = vmatprep.subr.mxu0 0.0
        %293 = vmatpush1.msra.mxu0 0.0
        %294 = vmatprep.subr.mxu0 0.0
        %295 = vmatpush1.msra.mxu0 0.0
        %296 = vmatprep.subr.mxu0 0.0
        %297 = vmatpush1.msra.mxu0 0.0
        %298 = vmatprep.subr.mxu0 0.0
        %299 = vmatpush1.msra.mxu0 0.0
        %300 = vmatprep.subr.mxu0 0.0
        %301 = vmatpush1.msra.mxu0 0.0
        %302 = vmatprep.subr.mxu0 0.0
        %303 = vmatpush1.msra.mxu0 0.0
        %304 = vmatprep.subr.mxu0 0.0
        %305 = vmatpush1.msra.mxu0 0.0
        %306 = vmatprep.mubr.f32.mxu0 0.0
        %307 = vmatmul.mubr.f32.gmra.mrb[0].mxu0 %v213
        %v308 = vpop.f32.mrb[0].mxu0
        %v309 = vadd.f32 0.0, %v308
        %v310 = vpop.f32.mrb[0].mxu0
        %311 = vmatprep.mubr.f32.mxu0 0.0
        %312 = vmatmul.mubr.f32.gmra.mrb[0].mxu0 %v216
        %v313 = vpop.f32.mrb[0].mxu0
        %v314 = vadd.f32 0.0, %v313
        %v315 = vpop.f32.mrb[0].mxu0
        %316 = vmatprep.mubr.f32.mxu0 0.0
        %317 = vmatmul.mubr.f32.gmra.mrb[0].mxu0 %v219
        %v318 = vpop.f32.mrb[0].mxu0
        %v319 = vadd.f32 0.0, %v318
        %v320 = vpop.f32.mrb[0].mxu0
        %321 = vmatprep.mubr.f32.mxu0 0.0
        %322 = vmatmul.mubr.f32.gmra.mrb[0].mxu0 %v222
        %v323 = vpop.f32.mrb[0].mxu0
        %v324 = vadd.f32 0.0, %v323
        %v325 = vpop.f32.mrb[0].mxu0
        %326 = vmatprep.mubr.f32.mxu0 0.0
        %327 = vmatmul.mubr.f32.gmra.mrb[0].mxu0 %v225
        %v328 = vpop.f32.mrb[0].mxu0
        %v329 = vadd.f32 0.0, %v328
        %v330 = vpop.f32.mrb[0].mxu0
        %331 = vmatprep.mubr.f32.mxu0 0.0
        %332 = vmatmul.mubr.f32.gmra.mrb[0].mxu0 %v228
        %v333 = vpop.f32.mrb[0].mxu0
        %v334 = vadd.f32 0.0, %v333
        %v335 = vpop.f32.mrb[0].mxu0
        %336 = vmatprep.mubr.f32.mxu0 0.0
        %337 = vmatmul.mubr.f32.gmra.mrb[0].mxu0 %v231
        %v338 = vpop.f32.mrb[0].mxu0
        %v339 = vadd.f32 0.0, %v338
        %v340 = vpop.f32.mrb[0].mxu0
        %341 = vmatprep.mubr.f32.mxu0 0.0
        %342 = vmatmul.mubr.f32.gmra.mrb[0].mxu0 %v234
        %v343 = vpop.f32.mrb[0].mxu0
        %v344 = vadd.f32 0.0, %v343
        %v345 = vpop.f32.mrb[0].mxu0
        %346 = vmatprep.mubr.f32.mxu0 0.0
        %347 = vmatmul.mubr.f32.gmra.mrb[0].mxu0 %v237
        %v348 = vpop.f32.mrb[0].mxu0
        %v349 = vadd.f32 0.0, %v348
        %v350 = vpop.f32.mrb[0].mxu0
        %351 = vmatprep.mubr.f32.mxu0 0.0
        %352 = vmatmul.mubr.f32.gmra.mrb[0].mxu0 %v240
        %v353 = vpop.f32.mrb[0].mxu0
        %v354 = vadd.f32 0.0, %v353
        %v355 = vpop.f32.mrb[0].mxu0
        %356 = vdwg.mxu0
        %s357 = sld [smem:[#allocation2]]
        %v358 = vmul.f32 %v309, %v193
        %v359 = vmul.f32 %v314, %v194
        %v360 = vmul.f32 %v319, %v195
        %v361 = vmul.f32 %v324, %v196
        %v362 = vmul.f32 %v329, %v197
        %v363 = vmul.f32 %v334, %v198
        %v364 = vmul.f32 %v339, %v199
        %v365 = vmul.f32 %v344, %v200
        %v366 = vmul.f32 %v349, %v201
        %v367 = vmul.f32 %v354, %v202
        %v368 = vsel %vm211, %v358, 0.0
        %369 = vadd.xlane.f32.xlu0 %v368
        %v370 = vpop.xlane.xlu0 %369
        %v371 = vsel %vm211, %v359, 0.0
        %372 = vadd.xlane.f32.xlu0 %v371
        %v373 = vpop.xlane.xlu0 %372
        %v374 = vsel %vm211, %v360, 0.0
        %375 = vadd.xlane.f32.xlu0 %v374
        %v376 = vpop.xlane.xlu0 %375
        %v377 = vsel %vm211, %v361, 0.0
        %378 = vadd.xlane.f32.xlu0 %v377
        %v379 = vpop.xlane.xlu0 %378
        %v380 = vsel %vm211, %v362, 0.0
        %381 = vadd.xlane.f32.xlu0 %v380
        %v382 = vpop.xlane.xlu0 %381
        %v383 = vsel %vm211, %v363, 0.0
        %384 = vadd.xlane.f32.xlu0 %v383
        %v385 = vpop.xlane.xlu0 %384
        %v386 = vsel %vm211, %v364, 0.0
        %387 = vadd.xlane.f32.xlu0 %v386
        %v388 = vpop.xlane.xlu0 %387
        %v389 = vsel %vm211, %v365, 0.0
        %390 = vadd.xlane.f32.xlu0 %v389
        %v391 = vpop.xlane.xlu0 %390
        %v392 = vsel %vm211, %v366, 0.0
        %393 = vadd.xlane.f32.xlu0 %v392
        %v394 = vpop.xlane.xlu0 %393
        %v395 = vsel %vm211, %v367, 0.0
        %396 = vadd.xlane.f32.xlu0 %v395
        %v397 = vpop.xlane.xlu0 %396
        %v398 = vstv %s357
        %v399 = vmul.f32 %v398, %v370
        %v400 = vmul.f32 %v398, %v373
        %v401 = vmul.f32 %v398, %v376
        %v402 = vmul.f32 %v398, %v379
        %v403 = vmul.f32 %v398, %v382
        %v404 = vmul.f32 %v398, %v385
        %v405 = vmul.f32 %v398, %v388
        %v406 = vmul.f32 %v398, %v391
        %v407 = vmul.f32 %v398, %v394
        %v408 = vmul.f32 %v398, %v397
        %v409 = vrcp.pop %v399
        %v410 = vrcp.pop %v400
        %v411 = vrcp.pop %v401
        %v412 = vrcp.pop %v402
        %v413 = vrcp.pop %v403
        %v414 = vrcp.pop %v404
        %v415 = vrcp.pop %v405
        %v416 = vrcp.pop %v406
        %v417 = vrcp.pop %v407
        %v418 = vrcp.pop %v408
        %v419 = vmul.f32 %v399, %v409
        %v420 = vmul.f32 %v400, %v410
        %v421 = vmul.f32 %v401, %v411
        %v422 = vmul.f32 %v402, %v412
        %v423 = vmul.f32 %v403, %v413
        %v424 = vmul.f32 %v404, %v414
        %v425 = vmul.f32 %v405, %v415
        %v426 = vmul.f32 %v406, %v416
        %v427 = vmul.f32 %v407, %v417
        %v428 = vmul.f32 %v408, %v418
        %v429 = vsub.f32 2.0, %v419
        %v430 = vsub.f32 2.0, %v420
        %v431 = vsub.f32 2.0, %v421
        %v432 = vsub.f32 2.0, %v422
        %v433 = vsub.f32 2.0, %v423
        %v434 = vsub.f32 2.0, %v424
        %v435 = vsub.f32 2.0, %v425
        %v436 = vsub.f32 2.0, %v426
        %v437 = vsub.f32 2.0, %v427
        %v438 = vsub.f32 2.0, %v428
        %v439 = vmul.f32 %v409, %v429
        %v440 = vmul.f32 %v410, %v430
        %v441 = vmul.f32 %v411, %v431
        %v442 = vmul.f32 %v412, %v432
        %v443 = vmul.f32 %v413, %v433
        %v444 = vmul.f32 %v414, %v434
        %v445 = vmul.f32 %v415, %v435
        %v446 = vmul.f32 %v416, %v436
        %v447 = vmul.f32 %v417, %v437
        %v448 = vmul.f32 %v418, %v438
        %v449 = vmul.f32 %v309, %v439
        %v450 = vmul.f32 %v314, %v440
        %v451 = vmul.f32 %v319, %v441
        %v452 = vmul.f32 %v324, %v442
        %v453 = vmul.f32 %v329, %v443
        %v454 = vmul.f32 %v334, %v444
        %v455 = vmul.f32 %v339, %v445
        %v456 = vmul.f32 %v344, %v446
        %v457 = vmul.f32 %v349, %v447
        %v458 = vmul.f32 %v354, %v448
        %459 = vst.msk [vmem:[%s173] sm:$0xff] %vm211, %v449
        %460 = vst.msk [vmem:[%s173 + $0x8] sm:$0xff] %vm211, %v450
        %461 = vst.msk [vmem:[%s173 + $0x10] sm:$0xff] %vm211, %v451
        %462 = vst.msk [vmem:[%s173 + $0x18] sm:$0xff] %vm211, %v452
        %463 = vst.msk [vmem:[%s173 + $0x20] sm:$0xff] %vm211, %v453
        %464 = vst.msk [vmem:[%s173 + $0x28] sm:$0xff] %vm211, %v454
        %465 = vst.msk [vmem:[%s173 + $0x30] sm:$0xff] %vm211, %v455
        %466 = vst.msk [vmem:[%s173 + $0x38] sm:$0xff] %vm211, %v456
        %467 = vst.msk [vmem:[%s173 + $0x40] sm:$0xff] %vm211, %v457
        %468 = vst.msk [vmem:[%s173 + $0x48] sm:$0xff] %vm211, %v458
        %s469 = sand.u32 %s91, 1
        %s470 = sand.u32 %s91, 1
        %s471 = smul.addr %s470, 80
        %s472 = scalar_lea.vmem [#allocation3], %s471
        // Predicated region
        $region33: #{tpu_custom_call.1} parent=31 // pred_check
          %p473 = pneg %p101
        $region34: #{tpu_custom_call.1} parent=31 // pred_check_branch
          %475 = sbr.rel (%p473) target = $region36
        $region35: #{tpu_custom_call.1} parent=31 // pred_region
          %s476 = smul.u32 10, %s15
          %s477 = ssub.s32 38, %s476
          %p478 = scmp.lt.s32.totalorder %s477, 10
          %s479 = scalar_select %p478, %s477, 10
          %s480 = smul.u32 128, %s479
          %p481 = scmp.ne.s32.totalorder 0, %s480
          %s482 = smul.addr %s476, 8
          %s483 = scalar_lea.vmem %s3, %s482
          // Predicated region
          $region37: #{tpu_custom_call.1} parent=35 // pred_check
            %p484 = pneg %p481
          $region38: #{tpu_custom_call.1} parent=35 // pred_check_branch
            %486 = sbr.rel (%p484) target = $region40
          $region39: #{tpu_custom_call.1} parent=35 // pred_region
            // Predicated region
            $region41: #{tpu_custom_call.1} parent=39 // pred_check
              _
            $region42: #{tpu_custom_call.1} parent=39 // pred_check_branch
              %488 = sbr.rel (0) target = $region44
            $region43: #{tpu_custom_call.1} parent=39 // pred_region
              // Predicated region
              $region63: #{tpu_custom_call.1} parent=43 // pred_check
                _
              $region64: #{tpu_custom_call.1} parent=43 // pred_check_branch
                %556 = sbr.rel (0) target = $region66
              $region65: #{tpu_custom_call.1} parent=43 // pred_region
                %s557 = sdiv.u32.pop %s479, 10
                %s558 = srem.u32.pop %s479, 10
                // While loop
                $region67: #{tpu_custom_call.1} parent=65 // loop_pre_header
                  _
                $region68: #{tpu_custom_call.1} parent=65 // loop_header
                  %s560 = sphi 0, %s562
                  %p561 = scmp.ge.s32.totalorder %s560, %s557
                  %s565 = sphi 0, %s590
                  %s566 = sphi %s472, %s593
                  %s567 = sphi %s483, %s594
                $region69: #{tpu_custom_call.1} parent=65 // loop_header_branch
                  %564 = sbr.rel (%p561) target = $region73
                $region70: #{tpu_custom_call.1} parent=65 // loop_body
                  %v568 = vld [vmem:[%s566] sm:$0xff]
                  %569 = vst [vmem:[%s567] sm:$0xff] %v568
                  %v570 = vld [vmem:[%s566 + $0x8] sm:$0xff]
                  %571 = vst [vmem:[%s567 + $0x8] sm:$0xff] %v570
                  %v572 = vld [vmem:[%s566 + $0x10] sm:$0xff]
                  %573 = vst [vmem:[%s567 + $0x10] sm:$0xff] %v572
                  %v574 = vld [vmem:[%s566 + $0x18] sm:$0xff]
                  %575 = vst [vmem:[%s567 + $0x18] sm:$0xff] %v574
                  %v576 = vld [vmem:[%s566 + $0x20] sm:$0xff]
                  %577 = vst [vmem:[%s567 + $0x20] sm:$0xff] %v576
                  %v578 = vld [vmem:[%s566 + $0x28] sm:$0xff]
                  %579 = vst [vmem:[%s567 + $0x28] sm:$0xff] %v578
                  %v580 = vld [vmem:[%s566 + $0x30] sm:$0xff]
                  %581 = vst [vmem:[%s567 + $0x30] sm:$0xff] %v580
                  %v582 = vld [vmem:[%s566 + $0x38] sm:$0xff]
                  %583 = vst [vmem:[%s567 + $0x38] sm:$0xff] %v582
                  %v584 = vld [vmem:[%s566 + $0x40] sm:$0xff]
                  %585 = vst [vmem:[%s567 + $0x40] sm:$0xff] %v584
                  %v586 = vld [vmem:[%s566 + $0x48] sm:$0xff]
                  %587 = vst [vmem:[%s567 + $0x48] sm:$0xff] %v586
                  %s588 = sadd.s32 1, %s565
                  %p589 = scmp.ge.s32.totalorder %s588, %s557
                  %s590 = scalar_select %p589, 0, %s588
                  %s591 = smul.u32 %s590, 80
                  %s592 = smul.u32 %s590, 80
                  %s593 = scalar_lea.vmem %s472, %s591 [#allocation3]
                  %s594 = scalar_lea.vmem %s483, %s592
                $region71: #{tpu_custom_call.1} parent=65 // loop_footer
                  %s562 = sadd.s32 %s560, 1
                $region72: #{tpu_custom_call.1} parent=65 // loop_footer_branch
                  %559 = sbr.rel target = $region68
                $region73: #{tpu_custom_call.1} parent=65 // loop_exit
                  _
                %s595 = sdiv.u32.pop %s479, 10
                %s596 = srem.u32.pop %s479, 10
                %s597 = smul.u32 %s595, 10
                %s598 = smul.u32 8, %s597
                %s599 = scalar_lea.vmem %s472, %s598 [#allocation3]
                %s600 = smul.u32 8, %s597
                %s601 = scalar_lea.vmem %s483, %s600
                // While loop
                $region74: #{tpu_custom_call.1} parent=65 // loop_pre_header
                  _
                $region75: #{tpu_custom_call.1} parent=65 // loop_header
                  %s603 = sphi 0, %s605
                  %p604 = scmp.ge.s32.totalorder %s603, %s596
                  %s608 = sphi 0, %s615
                  %s609 = sphi %s599, %s618
                  %s610 = sphi %s601, %s619
                $region76: #{tpu_custom_call.1} parent=65 // loop_header_branch
                  %607 = sbr.rel (%p604) target = $region80
                $region77: #{tpu_custom_call.1} parent=65 // loop_body
                  %v611 = vld [vmem:[%s609] sm:$0xff]
                  %612 = vst [vmem:[%s610] sm:$0xff] %v611
                  %s613 = sadd.s32 1, %s608
                  %p614 = scmp.ge.s32.totalorder %s613, %s596
                  %s615 = scalar_select %p614, 0, %s613
                  %s616 = smul.u32 %s615, 8
                  %s617 = smul.u32 %s615, 8
                  %s618 = scalar_lea.vmem %s599, %s616 [#allocation3]
                  %s619 = scalar_lea.vmem %s601, %s617
                $region78: #{tpu_custom_call.1} parent=65 // loop_footer
                  %s605 = sadd.s32 %s603, 1
                $region79: #{tpu_custom_call.1} parent=65 // loop_footer_branch
                  %602 = sbr.rel target = $region75
                $region80: #{tpu_custom_call.1} parent=65 // loop_exit
                  _
              $region66: #{tpu_custom_call.1} parent=43 // pred_fallthru
                _
              // Predicated region
              $region81: #{tpu_custom_call.1} parent=43 // pred_check
                _
              $region82: #{tpu_custom_call.1} parent=43 // pred_check_branch
                %621 = sbr.rel target = $region84
              $region83: #{tpu_custom_call.1} parent=43 // pred_region
                _
              $region84: #{tpu_custom_call.1} parent=43 // pred_fallthru
                _
            $region44: #{tpu_custom_call.1} parent=39 // pred_fallthru
              _
            // Predicated region
            $region45: #{tpu_custom_call.1} parent=39 // pred_check
              _
            $region46: #{tpu_custom_call.1} parent=39 // pred_check_branch
              %490 = sbr.rel target = $region48
            $region47: #{tpu_custom_call.1} parent=39 // pred_region
              %s492 = sdiv.u32.pop %s479, 10
              %s493 = srem.u32.pop %s479, 10
              // While loop
              $region49: #{tpu_custom_call.1} parent=47 // loop_pre_header
                _
              $region50: #{tpu_custom_call.1} parent=47 // loop_header
                %s495 = sphi 0, %s497
                %p496 = scmp.ge.s32.totalorder %s495, %s492
                %s500 = sphi 0, %s525
                %s501 = sphi %s472, %s528
                %s502 = sphi %s483, %s529
              $region51: #{tpu_custom_call.1} parent=47 // loop_header_branch
                %499 = sbr.rel (%p496) target = $region55
              $region52: #{tpu_custom_call.1} parent=47 // loop_body
                %v503 = vld [vmem:[%s501] sm:$0xff]
                %504 = vst [vmem:[%s502] sm:$0xff] %v503
                %v505 = vld [vmem:[%s501 + $0x8] sm:$0xff]
                %506 = vst [vmem:[%s502 + $0x8] sm:$0xff] %v505
                %v507 = vld [vmem:[%s501 + $0x10] sm:$0xff]
                %508 = vst [vmem:[%s502 + $0x10] sm:$0xff] %v507
                %v509 = vld [vmem:[%s501 + $0x18] sm:$0xff]
                %510 = vst [vmem:[%s502 + $0x18] sm:$0xff] %v509
                %v511 = vld [vmem:[%s501 + $0x20] sm:$0xff]
                %512 = vst [vmem:[%s502 + $0x20] sm:$0xff] %v511
                %v513 = vld [vmem:[%s501 + $0x28] sm:$0xff]
                %514 = vst [vmem:[%s502 + $0x28] sm:$0xff] %v513
                %v515 = vld [vmem:[%s501 + $0x30] sm:$0xff]
                %516 = vst [vmem:[%s502 + $0x30] sm:$0xff] %v515
                %v517 = vld [vmem:[%s501 + $0x38] sm:$0xff]
                %518 = vst [vmem:[%s502 + $0x38] sm:$0xff] %v517
                %v519 = vld [vmem:[%s501 + $0x40] sm:$0xff]
                %520 = vst [vmem:[%s502 + $0x40] sm:$0xff] %v519
                %v521 = vld [vmem:[%s501 + $0x48] sm:$0xff]
                %522 = vst [vmem:[%s502 + $0x48] sm:$0xff] %v521
                %s523 = sadd.s32 1, %s500
                %p524 = scmp.ge.s32.totalorder %s523, %s492
                %s525 = scalar_select %p524, 0, %s523
                %s526 = smul.u32 %s525, 80
                %s527 = smul.u32 %s525, 80
                %s528 = scalar_lea.vmem %s472, %s526 [#allocation3]
                %s529 = scalar_lea.vmem %s483, %s527
              $region53: #{tpu_custom_call.1} parent=47 // loop_footer
                %s497 = sadd.s32 %s495, 1
              $region54: #{tpu_custom_call.1} parent=47 // loop_footer_branch
                %494 = sbr.rel target = $region50
              $region55: #{tpu_custom_call.1} parent=47 // loop_exit
                _
              %s530 = sdiv.u32.pop %s479, 10
              %s531 = srem.u32.pop %s479, 10
              %s532 = smul.u32 %s530, 10
              %s533 = smul.u32 8, %s532
              %s534 = scalar_lea.vmem %s472, %s533 [#allocation3]
              %s535 = smul.u32 8, %s532
              %s536 = scalar_lea.vmem %s483, %s535
              // While loop
              $region56: #{tpu_custom_call.1} parent=47 // loop_pre_header
                _
              $region57: #{tpu_custom_call.1} parent=47 // loop_header
                %s538 = sphi 0, %s540
                %p539 = scmp.ge.s32.totalorder %s538, %s531
                %s543 = sphi 0, %s550
                %s544 = sphi %s534, %s553
                %s545 = sphi %s536, %s554
              $region58: #{tpu_custom_call.1} parent=47 // loop_header_branch
                %542 = sbr.rel (%p539) target = $region62
              $region59: #{tpu_custom_call.1} parent=47 // loop_body
                %v546 = vld [vmem:[%s544] sm:$0xff]
                %547 = vst [vmem:[%s545] sm:$0xff] %v546
                %s548 = sadd.s32 1, %s543
                %p549 = scmp.ge.s32.totalorder %s548, %s531
                %s550 = scalar_select %p549, 0, %s548
                %s551 = smul.u32 %s550, 8
                %s552 = smul.u32 %s550, 8
                %s553 = scalar_lea.vmem %s534, %s551 [#allocation3]
                %s554 = scalar_lea.vmem %s536, %s552
              $region60: #{tpu_custom_call.1} parent=47 // loop_footer
                %s540 = sadd.s32 %s538, 1
              $region61: #{tpu_custom_call.1} parent=47 // loop_footer_branch
                %537 = sbr.rel target = $region57
              $region62: #{tpu_custom_call.1} parent=47 // loop_exit
                _
            $region48: #{tpu_custom_call.1} parent=39 // pred_fallthru
              _
          $region40: #{tpu_custom_call.1} parent=35 // pred_fallthru
            _
          %622 = vnop
        $region36: #{tpu_custom_call.1} parent=31 // pred_fallthru
          _
      $region32: #{tpu_custom_call.1} parent=5 // pred_fallthru
        _
      %p623 = scmp.le.s32.totalorder 2, %s10
      // Predicated region
      $region85: #{tpu_custom_call.1} parent=5 // pred_check
        %p624 = pneg %p623
      $region86: #{tpu_custom_call.1} parent=5 // pred_check_branch
        %626 = sbr.rel (%p624) target = $region88
      $region87: #{tpu_custom_call.1} parent=5 // pred_region
        %s627 = ssub.s32 %s10, 2
        // Predicated region
        $region89: #{tpu_custom_call.1} parent=87 // pred_check
          %p628 = pneg %p107
        $region90: #{tpu_custom_call.1} parent=87 // pred_check_branch
          %630 = sbr.rel (%p628) target = $region92
        $region91: #{tpu_custom_call.1} parent=87 // pred_region
          %s631 = sand.u32 %s92, 1
          %s632 = sand.u32 %s92, 1
          %s633 = smul.addr %s632, 80
          %s634 = scalar_lea.vmem [#allocation3], %s633
        $region92: #{tpu_custom_call.1} parent=87 // pred_fallthru
          _
      $region88: #{tpu_custom_call.1} parent=5 // pred_fallthru
        _
    $region6: #{tpu_custom_call.1} parent=1 // loop_footer
      %s14 = sadd.s32 1, %s10
    $region7: #{tpu_custom_call.1} parent=1 // loop_footer_branch
      %9 = sbr.rel target = $region3
    $region8: #{tpu_custom_call.1} parent=1 // loop_exit
      _

</llo_original>
